<compile_context>
chip_gen: v5e
topology: v5e:2x2
jax: 0.10.0
libtpu: 0.0.40
codegen_flags: <defaults>
</compile_context>

<pallas_src>
import math

import jax
import jax.numpy as jnp
from jax.experimental import pallas as pl
from jax.experimental.pallas import tpu as pltpu


# ----------------------------- Pallas kernels ------------------------------

def _layernorm_kernel_grouped(x_ref, p_ref, e_ref, w_ref, b_ref, o_ref):
    # x_ref: (TM, L), L = groups * C; every 128-lane row holds `groups` logical rows.
    # p_ref: (L, G) segment-averaging matrix (1/C inside each C-segment).
    # e_ref: (G, L) segment-expansion matrix (1.0 inside each C-segment).
    # S = P @ E is the block-diagonal averaging matrix; the factored form keeps the
    # MXU MAC count at 2*L*G per row instead of L*L (keeps v5e memory-bound).
    x = x_ref[...].astype(jnp.float32)
    p = p_ref[...]
    e = e_ref[...]
    mu = jnp.dot(jnp.dot(x, p, preferred_element_type=jnp.float32), e,
                 preferred_element_type=jnp.float32)
    d = x - mu
    var = jnp.dot(jnp.dot(d * d, p, preferred_element_type=jnp.float32), e,
                  preferred_element_type=jnp.float32)       # biased variance
    y = d * jax.lax.rsqrt(var + 1e-5)                       # EUP rsqrt, no vdiv/vsqrt
    o_ref[...] = (y * w_ref[...] + b_ref[...]).astype(o_ref.dtype)


def _layernorm_kernel_rowwise(x_ref, w_ref, b_ref, o_ref):
    # x_ref: (TM, C) with C already a multiple of 128 (or too large to pack).
    x = x_ref[...].astype(jnp.float32)
    mu = jnp.mean(x, axis=-1, keepdims=True)
    d = x - mu
    var = jnp.mean(d * d, axis=-1, keepdims=True)            # unbiased=False
    y = d * jax.lax.rsqrt(var + 1e-5)
    o_ref[...] = (y * w_ref[...] + b_ref[...]).astype(o_ref.dtype)


# ----------------------------- tiling policy ---------------------------------

def _round_up(a, b):
    return -(-a // b) * b


def _vmem_capacity_bytes():
    try:
        cap = getattr(pltpu.get_tpu_info(), "vmem_capacity_bytes", None)
        if cap:
            return int(cap)
    except Exception:
        pass
    return 64 << 20                      # assume the tightest generation (v7x per-TC)


def _pick_row_tile(R, L, in_itemsize, row_tile, min_steps):
    """Row tile (sublane-aligned, VMEM-budgeted) and an explicit vmem_limit_bytes."""
    sub = 8 if in_itemsize >= 4 else (16 if in_itemsize == 2 else 32)
    vmem_cap = _vmem_capacity_bytes()
    # Live bytes per tile row: double-buffered input + double-buffered output
    # (input dtype) + ~4 f32 temporaries inside the kernel body.
    per_row = L * (4 * in_itemsize + 4 * 4)
    budget = min(vmem_cap // 3, 24 << 20)          # headroom even on v7x's 64 MiB
    tm = min(row_tile, max(sub, budget // per_row))
    # Guarantee >= min_steps grid steps for non-tiny inputs, so double-buffering
    # engages and v7x's two TensorCores both get rows.
    if R >= min_steps * sub:
        tm = min(tm, R // min_steps)
    tm = max(sub, (tm // sub) * sub)
    tm = min(tm, _round_up(R, sub))                # never pad past a single block
    vmem_limit = max(32 << 20, min(vmem_cap - (16 << 20), 100 << 20))
    return tm, vmem_limit


# ----------------------------- wrapper --------------------------------------

def with_bias_layernorm(x, weight, bias, *, row_tile=4096, min_grid_steps=4,
                        max_packed_width=2048):
    """LayerNorm over the last dim with weight and bias (PyTorch WithBias_LayerNorm)."""
    orig_shape = x.shape
    C = int(orig_shape[-1])
    N = 1
    for d in orig_shape[:-1]:
        N *= int(d)

    # Lane-dense packing: make the lane (last) dim a multiple of 128 by packing
    # `groups` consecutive logical rows into one physical row of L = lcm(C, 128).
    groups = 1
    L = C
    if C % 128 != 0:
        L_cand = (C * 128) // math.gcd(C, 128)     # lcm(C, 128), multiple of 128
        if L_cand <= max_packed_width:
            L = L_cand
            groups = L // C

    in_itemsize = jnp.dtype(x.dtype).itemsize
    R = -(-N // groups)                            # packed rows needed
    tm, vmem_limit = _pick_row_tile(R, L, in_itemsize, row_tile, min_grid_steps)
    R_pad = _round_up(R, tm)

    # Pad (zeros) up to a whole number of tiles; padded rows normalize to `bias`
    # (finite) and are sliced away below. Avoids single-block / tm=8 perf cliffs.
    flat = x.reshape(-1)
    pad = R_pad * L - N * C
    if pad:
        flat = jnp.pad(flat, (0, pad))
    x2 = flat.reshape(R_pad, L)

    w_t = jnp.tile(weight.astype(jnp.float32).reshape(-1), groups).reshape(1, L)
    b_t = jnp.tile(bias.astype(jnp.float32).reshape(-1), groups).reshape(1, L)

    grid = (R_pad // tm,)
    cparams = pltpu.CompilerParams(
        dimension_semantics=("parallel",),
        vmem_limit_bytes=vmem_limit,
    )

    if groups > 1:
        G = groups
        # Factored block-diagonal averaging matrix: S = P @ E.
        p = jnp.kron(jnp.eye(G, dtype=jnp.float32),
                     jnp.full((C, 1), 1.0 / C, dtype=jnp.float32))    # (L, G)
        e = jnp.kron(jnp.eye(G, dtype=jnp.float32),
                     jnp.ones((1, C), dtype=jnp.float32))             # (G, L)
        out = pl.pallas_call(
            _layernorm_kernel_grouped,
            out_shape=jax.ShapeDtypeStruct((R_pad, L), x.dtype),
            grid=grid,
            in_specs=[pl.BlockSpec((tm, L), lambda i: (i, 0)),
                      pl.BlockSpec((L, G), lambda i: (0, 0)),
                      pl.BlockSpec((G, L), lambda i: (0, 0)),
                      pl.BlockSpec((1, L), lambda i: (0, 0)),
                      pl.BlockSpec((1, L), lambda i: (0, 0))],
            out_specs=pl.BlockSpec((tm, L), lambda i: (i, 0)),
            compiler_params=cparams,
        )(x2, p, e, w_t, b_t)
    else:
        out = pl.pallas_call(
            _layernorm_kernel_rowwise,
            out_shape=jax.ShapeDtypeStruct((R_pad, L), x.dtype),
            grid=grid,
            in_specs=[pl.BlockSpec((tm, L), lambda i: (i, 0)),
                      pl.BlockSpec((1, L), lambda i: (0, 0)),
                      pl.BlockSpec((1, L), lambda i: (0, 0))],
            out_specs=pl.BlockSpec((tm, L), lambda i: (i, 0)),
            compiler_params=cparams,
        )(x2, w_t, b_t)

    out_flat = out.reshape(-1)
    if pad:
        out_flat = out_flat[:N * C]
    return out_flat.reshape(orig_shape)


# ----------------------------- main ------------------------------------------

if __name__ == "__main__":
    key = jax.random.PRNGKey(0)
    kx, kw, kb, kx2, kx3, kw3, kb3 = jax.random.split(key, 7)

    def ref(x, w, b):
        mu = jnp.mean(x, -1, keepdims=True)
        var = jnp.mean((x - mu) ** 2, -1, keepdims=True)    # unbiased=False
        return (x - mu) / jnp.sqrt(var + 1e-5) * w + b

    fwd = jax.jit(with_bias_layernorm)

    # 1) Restormer-style: channels-last LayerNorm with small C=8
    #    -> lane-dense grouped path (groups=16, L=128).
    B, HW, C = 2, 256, 8
    x = jax.random.normal(kx, (B, HW, C), jnp.float32)
    w = 1.0 + 0.1 * jax.random.normal(kw, (C,), jnp.float32)
    b = 0.1 * jax.random.normal(kb, (C,), jnp.float32)
    out = fwd(x, w, b)
    jax.block_until_ready(out)
    assert out.shape == x.shape and out.dtype == x.dtype
    assert jnp.allclose(out, ref(x, w, b), atol=1e-5, rtol=1e-5)

    # 2) C already a multiple of 128 -> plain row-wise path.
    x2 = jax.random.normal(kx2, (2, 64, 128), jnp.float32)
    w2 = jnp.ones((128,), jnp.float32)
    b2 = jnp.zeros((128,), jnp.float32)
    out2 = fwd(x2, w2, b2)
    jax.block_until_ready(out2)
    assert jnp.allclose(out2, ref(x2, w2, b2), atol=1e-5, rtol=1e-5)

    # 3) C=48 (not a divisor of 128) with a row count that needs padding:
    #    exercises the lcm-based packing (groups=8, L=384) and pad/slice path.
    x3 = jax.random.normal(kx3, (2, 7, 45, 48), jnp.float32)
    w3 = 1.0 + 0.1 * jax.random.normal(kw3, (48,), jnp.float32)
    b3 = 0.1 * jax.random.normal(kb3, (48,), jnp.float32)
    out3 = fwd(x3, w3, b3)
    jax.block_until_ready(out3)
    assert out3.shape == x3.shape
    assert jnp.allclose(out3, ref(x3, w3, b3), atol=3e-5, rtol=3e-5)

    print("KERNEL_OK")
</pallas_src>

<mosaic_0001>
module attributes {stable_mosaic.version = 11 : i64} {
  func.func @_layernorm_kernel_grouped(%arg0: i32, %arg1: memref<8x128xf32, #tpu.memory_space<vmem>>, %arg2: memref<128x16xf32, #tpu.memory_space<vmem>>, %arg3: memref<16x128xf32, #tpu.memory_space<vmem>>, %arg4: memref<1x128xf32, #tpu.memory_space<vmem>>, %arg5: memref<1x128xf32, #tpu.memory_space<vmem>>, %arg6: memref<8x128xf32, #tpu.memory_space<vmem>>) attributes {dimension_semantics = [#tpu.dimension_semantics<parallel>], iteration_bounds = array<i64: 4>, scalar_prefetch = 0 : i64, scratch_operands = 0 : i64, tpu.core_type = #tpu.core_type<tc>, window_params = [{transform_indices = @transform_0, window_bounds = array<i64: 8, 128>}, {pipeline_mode = #tpu.pipeline_mode<synchronous>, transform_indices = @transform_1, window_bounds = array<i64: 128, 16>}, {pipeline_mode = #tpu.pipeline_mode<synchronous>, transform_indices = @transform_2, window_bounds = array<i64: 16, 128>}, {pipeline_mode = #tpu.pipeline_mode<synchronous>, transform_indices = @transform_3, window_bounds = array<i64: 1, 128>}, {pipeline_mode = #tpu.pipeline_mode<synchronous>, transform_indices = @transform_4, window_bounds = array<i64: 1, 128>}, {transform_indices = @transform_5, window_bounds = array<i64: 8, 128>}]} {
    %c0 = arith.constant 0 : index
    %c0_0 = arith.constant 0 : index
    %0 = vector.load %arg1[%c0, %c0_0] : memref<8x128xf32, #tpu.memory_space<vmem>>, vector<8x128xf32>
    %c0_1 = arith.constant 0 : index
    %c0_2 = arith.constant 0 : index
    %1 = vector.load %arg2[%c0_1, %c0_2] : memref<128x16xf32, #tpu.memory_space<vmem>>, vector<128x16xf32>
    %c0_3 = arith.constant 0 : index
    %c0_4 = arith.constant 0 : index
    %2 = vector.load %arg3[%c0_3, %c0_4] : memref<16x128xf32, #tpu.memory_space<vmem>>, vector<16x128xf32>
    %cst = arith.constant dense<0.000000e+00> : vector<8x16xf32>
    %3 = tpu.matmul %0, %1, %cst {dimension_numbers = #tpu.dot_dimension_numbers<[1], [0], [0], [1], [0, 0, 1, 1], [], []>} : vector<8x128xf32>, vector<128x16xf32>, vector<8x16xf32> -> vector<8x16xf32>
    %cst_5 = arith.constant dense<0.000000e+00> : vector<8x128xf32>
    %4 = tpu.matmul %3, %2, %cst_5 {dimension_numbers = #tpu.dot_dimension_numbers<[1], [0], [0], [1], [0, 0, 1, 1], [], []>} : vector<8x16xf32>, vector<16x128xf32>, vector<8x128xf32> -> vector<8x128xf32>
    %5 = arith.subf %0, %4 : vector<8x128xf32>
    %6 = arith.mulf %5, %5 : vector<8x128xf32>
    %cst_6 = arith.constant dense<0.000000e+00> : vector<8x16xf32>
    %7 = tpu.matmul %6, %1, %cst_6 {dimension_numbers = #tpu.dot_dimension_numbers<[1], [0], [0], [1], [0, 0, 1, 1], [], []>} : vector<8x128xf32>, vector<128x16xf32>, vector<8x16xf32> -> vector<8x16xf32>
    %cst_7 = arith.constant dense<0.000000e+00> : vector<8x128xf32>
    %8 = tpu.matmul %7, %2, %cst_7 {dimension_numbers = #tpu.dot_dimension_numbers<[1], [0], [0], [1], [0, 0, 1, 1], [], []>} : vector<8x16xf32>, vector<16x128xf32>, vector<8x128xf32> -> vector<8x128xf32>
    %cst_8 = arith.constant 9.99999974E-6 : f32
    %9 = vector.broadcast %cst_8 : f32 to vector<8x128xf32>
    %10 = arith.addf %8, %9 : vector<8x128xf32>
    %11 = math.rsqrt %10 : vector<8x128xf32>
    %12 = arith.mulf %5, %11 : vector<8x128xf32>
    %c0_9 = arith.constant 0 : index
    %c0_10 = arith.constant 0 : index
    %13 = vector.load %arg4[%c0_9, %c0_10] : memref<1x128xf32, #tpu.memory_space<vmem>>, vector<1x128xf32>
    %14 = vector.broadcast %13 : vector<1x128xf32> to vector<8x128xf32>
    %15 = arith.mulf %12, %14 : vector<8x128xf32>
    %c0_11 = arith.constant 0 : index
    %c0_12 = arith.constant 0 : index
    %16 = vector.load %arg5[%c0_11, %c0_12] : memref<1x128xf32, #tpu.memory_space<vmem>>, vector<1x128xf32>
    %17 = vector.broadcast %16 : vector<1x128xf32> to vector<8x128xf32>
    %18 = arith.addf %15, %17 : vector<8x128xf32>
    %c0_13 = arith.constant 0 : index
    %c0_14 = arith.constant 0 : index
    %19 = vector.load %arg6[%c0_13, %c0_14] : memref<8x128xf32, #tpu.memory_space<vmem>>, vector<8x128xf32>
    tpu.vector_store %arg6[%c0_13, %c0_14], %18 {strides = array<i32>} : memref<8x128xf32, #tpu.memory_space<vmem>>, vector<8x128xf32>,
    return
  }
  func.func @transform_0(%arg0: i32) -> (i32, i32) {
    %c0_i32 = arith.constant 0 : i32
    %c0_i32_0 = arith.constant 0 : i32
    return %arg0, %c0_i32 : i32, i32
  }
  func.func @transform_1(%arg0: i32) -> (i32, i32) {
    %c0_i32 = arith.constant 0 : i32
    %c0_i32_0 = arith.constant 0 : i32
    %c0_i32_1 = arith.constant 0 : i32
    return %c0_i32, %c0_i32_0 : i32, i32
  }
  func.func @transform_2(%arg0: i32) -> (i32, i32) {
    %c0_i32 = arith.constant 0 : i32
    %c0_i32_0 = arith.constant 0 : i32
    %c0_i32_1 = arith.constant 0 : i32
    return %c0_i32, %c0_i32_0 : i32, i32
  }
  func.func @transform_3(%arg0: i32) -> (i32, i32) {
    %c0_i32 = arith.constant 0 : i32
    %c0_i32_0 = arith.constant 0 : i32
    %c0_i32_1 = arith.constant 0 : i32
    return %c0_i32, %c0_i32_0 : i32, i32
  }
  func.func @transform_4(%arg0: i32) -> (i32, i32) {
    %c0_i32 = arith.constant 0 : i32
    %c0_i32_0 = arith.constant 0 : i32
    %c0_i32_1 = arith.constant 0 : i32
    return %c0_i32, %c0_i32_0 : i32, i32
  }
  func.func @transform_5(%arg0: i32) -> (i32, i32) {
    %c0_i32 = arith.constant 0 : i32
    %c0_i32_0 = arith.constant 0 : i32
    return %arg0, %c0_i32 : i32, i32
  }
}

</mosaic_0001>

<llo_original>
// kernel: tile.13
$region0: #{tile.13}
  #allocation0 [shape = 's32[1]{0}', space=sflag, size = 0x4, scoped, tag = 'scoped memory for tile.13']
  %s0 = inlined_call_operand.vmem [shape: f32[8], index: 0, kind: input, shape index: {}]
  %s1 = inlined_call_operand.vmem [shape: f32[16,8], index: 1, kind: output, shape index: {}]
  // Predicated region
  $region2: #{tile.13} parent=0 // pred_check
    _
  $region3: #{tile.13} parent=0 // pred_check_branch
    %3 = sbr.rel (0) target = $region5
  $region4: #{tile.13} parent=0 // pred_region
    _
  $region5: #{tile.13} parent=0 // pred_fallthru
    _
  %v4 = vld [vmem:[%s0] ss:$0 sm:$0xff]
  %5 = vst [vmem:[%s1] sm:$0xff] %v4
  %s6 = scalar_lea.vmem %s1, 8
  %7 = vst [vmem:[%s6] sm:$0xff] %v4

// kernel: tile.14
$region0: #{tile.14}
  %s0 = inlined_call_operand.vmem [shape: f32[16,8], index: 0, kind: input, shape index: {}]
  %s1 = inlined_call_operand.vmem [shape: f32[1,128], index: 1, kind: output, shape index: {}]
  $region1: #{tile.14} parent=0
    #allocation0 [shape = 'u8[4096]{0}', space=vmem, size = 0x1000, scoped, tag = 'scoped mem for output reshape']
    %v2 = vld [vmem:[%s0] sm:$0x1]
    %vm3 = vcmask 64512
    %4 = vst.msk [vmem:[#allocation0] sm:$0x1] %vm3, %v2
    %s5 = scalar_lea.vmem %s0, 15
    %v6 = vld [vmem:[%s5] sm:$0x1]
    %7 = vrot.lane.b32.xlu0 %v6, 120
    %v8 = vpop.permute.xlu0 %7
    %vm9 = vcmask 1048512
    %10 = vst.msk [vmem:[#allocation0] sm:$0x1] %vm9, %v8
    %s11 = scalar_lea.vmem %s0, 14
    %v12 = vld [vmem:[%s11] sm:$0x1]
    %13 = vrot.lane.b32.xlu0 %v12, 112
    %v14 = vpop.permute.xlu0 %13
    %vm15 = vcmask 982912
    %16 = vst.msk [vmem:[#allocation0] sm:$0x1] %vm15, %v14
    %s17 = scalar_lea.vmem %s0, 13
    %v18 = vld [vmem:[%s17] sm:$0x1]
    %19 = vrot.lane.b32.xlu0 %v18, 104
    %v20 = vpop.permute.xlu0 %19
    %vm21 = vcmask 917312
    %22 = vst.msk [vmem:[#allocation0] sm:$0x1] %vm21, %v20
    %s23 = scalar_lea.vmem %s0, 12
    %v24 = vld [vmem:[%s23] sm:$0x1]
    %25 = vrot.lane.b32.xlu0 %v24, 96
    %v26 = vpop.permute.xlu0 %25
    %vm27 = vcmask 851712
    %28 = vst.msk [vmem:[#allocation0] sm:$0x1] %vm27, %v26
    %s29 = scalar_lea.vmem %s0, 11
    %v30 = vld [vmem:[%s29] sm:$0x1]
    %31 = vrot.lane.b32.xlu0 %v30, 88
    %v32 = vpop.permute.xlu0 %31
    %vm33 = vcmask 786112
    %34 = vst.msk [vmem:[#allocation0] sm:$0x1] %vm33, %v32
    %s35 = scalar_lea.vmem %s0, 10
    %v36 = vld [vmem:[%s35] sm:$0x1]
    %37 = vrot.lane.b32.xlu0 %v36, 80
    %v38 = vpop.permute.xlu0 %37
    %vm39 = vcmask 720512
    %40 = vst.msk [vmem:[#allocation0] sm:$0x1] %vm39, %v38
    %s41 = scalar_lea.vmem %s0, 9
    %v42 = vld [vmem:[%s41] sm:$0x1]
    %43 = vrot.lane.b32.xlu0 %v42, 72
    %v44 = vpop.permute.xlu0 %43
    %vm45 = vcmask 654912
    %46 = vst.msk [vmem:[#allocation0] sm:$0x1] %vm45, %v44
    %s47 = scalar_lea.vmem %s0, 8
    %v48 = vld [vmem:[%s47] sm:$0x1]
    %49 = vrot.lane.b32.xlu0 %v48, 64
    %v50 = vpop.permute.xlu0 %49
    %vm51 = vcmask 589312
    %52 = vst.msk [vmem:[#allocation0] sm:$0x1] %vm51, %v50
    %s53 = scalar_lea.vmem %s0, 7
    %v54 = vld [vmem:[%s53] sm:$0x1]
    %55 = vrot.lane.b32.xlu0 %v54, 56
    %v56 = vpop.permute.xlu0 %55
    %vm57 = vcmask 523712
    %58 = vst.msk [vmem:[#allocation0] sm:$0x1] %vm57, %v56
    %s59 = scalar_lea.vmem %s0, 6
    %v60 = vld [vmem:[%s59] sm:$0x1]
    %61 = vrot.lane.b32.xlu0 %v60, 48
    %v62 = vpop.permute.xlu0 %61
    %vm63 = vcmask 458112
    %64 = vst.msk [vmem:[#allocation0] sm:$0x1] %vm63, %v62
    %s65 = scalar_lea.vmem %s0, 5
    %v66 = vld [vmem:[%s65] sm:$0x1]
    %67 = vrot.lane.b32.xlu0 %v66, 40
    %v68 = vpop.permute.xlu0 %67
    %vm69 = vcmask 392512
    %70 = vst.msk [vmem:[#allocation0] sm:$0x1] %vm69, %v68
    %s71 = scalar_lea.vmem %s0, 4
    %v72 = vld [vmem:[%s71] sm:$0x1]
    %73 = vrot.lane.b32.xlu0 %v72, 32
    %v74 = vpop.permute.xlu0 %73
    %vm75 = vcmask 326912
    %76 = vst.msk [vmem:[#allocation0] sm:$0x1] %vm75, %v74
    %s77 = scalar_lea.vmem %s0, 3
    %v78 = vld [vmem:[%s77] sm:$0x1]
    %79 = vrot.lane.b32.xlu0 %v78, 24
    %v80 = vpop.permute.xlu0 %79
    %vm81 = vcmask 261312
    %82 = vst.msk [vmem:[#allocation0] sm:$0x1] %vm81, %v80
    %s83 = scalar_lea.vmem %s0, 2
    %v84 = vld [vmem:[%s83] sm:$0x1]
    %85 = vrot.lane.b32.xlu0 %v84, 16
    %v86 = vpop.permute.xlu0 %85
    %vm87 = vcmask 195712
    %88 = vst.msk [vmem:[#allocation0] sm:$0x1] %vm87, %v86
    %s89 = scalar_lea.vmem %s0, 1
    %v90 = vld [vmem:[%s89] sm:$0x1]
    %91 = vrot.lane.b32.xlu0 %v90, 8
    %v92 = vpop.permute.xlu0 %91
    %vm93 = vcmask 130112
    %94 = vst.msk [vmem:[#allocation0] sm:$0x1] %vm93, %v92
    %s96 = ssub.s32 2, 1
    %v97 = vld [vmem:[#allocation0] sm:%s96]
    %s99 = ssub.s32 2, 1
    %100 = vst [vmem:[%s1] sm:%s99] %v97

// kernel: with_bias_layernorm.1
$region0: #{with_bias_layernorm.1}
  #allocation0 [shape = 'u32[]', space=smem, size = 0x4, offset = 0x4, fixed_abs, tag = 'smem constant byte address 0x4 - core index']
  #allocation1 [shape = 'u32[72,128]{1,0:T(1,128)}', space=vmem, size = 0x9000, scoped, tag = 'internal scratch']
  %s0 = inlined_call_operand.vmem [shape: f32[32,128], index: 0, kind: input, shape index: {}]
  %s1 = inlined_call_operand.vmem [shape: f32[128,16], index: 1, kind: input, shape index: {}]
  %s2 = inlined_call_operand.vmem [shape: f32[16,128], index: 2, kind: input, shape index: {}]
  %s3 = inlined_call_operand.vmem [shape: f32[1,128], index: 3, kind: input, shape index: {}]
  %s4 = inlined_call_operand.vmem [shape: f32[1,128], index: 4, kind: input, shape index: {}]
  %s5 = inlined_call_operand.vmem [shape: f32[32,128], index: 5, kind: output, shape index: {}]
  %s6 = sld [smem:[#allocation0]]
  $region53: #{with_bias_layernorm.1} parent=0
    _
  %s8 = ssub.s32 1, %s6
  %s9 = scalar_select 0, %s8, %s6
  loop: start=0, step=1, limit=6
  $region2: #{with_bias_layernorm.1} parent=0 // loop_pre_header
    _
  $region3: #{with_bias_layernorm.1} parent=0 // loop_header
    %s11 = sphi 0, %s15
    %p12 = scmp.ge.s32.totalorder %s11, 6
    %s21 = sphi 0, %s23
    %s24 = sphi 0, %s21
    %s25 = sphi 0, %s24
    %s41 = sphi 0, %s25
    %s45 = sphi 0, %s45
    %s47 = sphi 0, %s45
    %s48 = sphi 0, %s47
    %s62 = sphi 0, %s48
    %s66 = sphi 0, %s66
    %s68 = sphi 0, %s66
    %s69 = sphi 0, %s68
    %s83 = sphi 0, %s69
    %s87 = sphi 0, %s87
    %s89 = sphi 0, %s87
    %s90 = sphi 0, %s89
    %s104 = sphi 0, %s90
    %s108 = sphi 0, %s108
    %s110 = sphi 0, %s108
    %s111 = sphi 0, %s110
    %s125 = sphi 0, %s111
    %s131 = sphi 0, %s133
    %s134 = sphi 0, %s131
    %s135 = sphi 0, %s134
    %s151 = sphi 0, %s135
  $region4: #{with_bias_layernorm.1} parent=0 // loop_header_branch
    %14 = sbr.rel (%p12) target = $region8
  $region5: #{with_bias_layernorm.1} parent=0 // loop_body
    %s16 = ssub.s32 %s11, 1
    %s17 = ssub.s32 %s11, 2
    %s18 = sadd.s32 %s11, 1
    %s19 = ssub.s32 %s11, %s18
    %p20 = scmp.eq.s32.totalorder %s19, 0
    %s22 = sadd.s32 %s21, 1
    %s23 = scalar_select %p20, %s21, %s22
    %p26 = pneg %p20
    %p27 = scmp.eq.s32.totalorder %s11, 3
    %p28 = por %p26, %p27
    %p29 = scmp.ne.s32.totalorder %s21, %s24
    %p30 = scmp.eq.s32.totalorder %s11, 0
    %p31 = por %p29, %p30
    %p32 = scmp.ne.s32.totalorder %s21, %s24
    %p33 = scmp.eq.s32.totalorder %s16, 3
    %p34 = por %p32, %p33
    %p35 = scmp.ne.s32.totalorder %s24, %s25
    %p36 = scmp.eq.s32.totalorder %s16, 0
    %p37 = por %p35, %p36
    %p38 = scmp.ne.s32.totalorder %s24, %s25
    %p39 = scmp.eq.s32.totalorder %s17, 3
    %p40 = por %p38, %p39
    %p42 = scmp.ne.s32.totalorder %s25, %s41
    %p43 = scmp.eq.s32.totalorder %s17, 0
    %p44 = por %p42, %p43
    %s46 = sadd.s32 %s45, 1
    %p49 = scmp.eq.s32.totalorder %s11, 3
    %p50 = scmp.ne.s32.totalorder %s45, %s47
    %p51 = scmp.eq.s32.totalorder %s11, 0
    %p52 = por %p50, %p51
    %p53 = scmp.ne.s32.totalorder %s45, %s47
    %p54 = scmp.eq.s32.totalorder %s16, 3
    %p55 = por %p53, %p54
    %p56 = scmp.ne.s32.totalorder %s47, %s48
    %p57 = scmp.eq.s32.totalorder %s16, 0
    %p58 = por %p56, %p57
    %p59 = scmp.ne.s32.totalorder %s47, %s48
    %p60 = scmp.eq.s32.totalorder %s17, 3
    %p61 = por %p59, %p60
    %p63 = scmp.ne.s32.totalorder %s48, %s62
    %p64 = scmp.eq.s32.totalorder %s17, 0
    %p65 = por %p63, %p64
    %s67 = sadd.s32 %s66, 1
    %p70 = scmp.eq.s32.totalorder %s11, 3
    %p71 = scmp.ne.s32.totalorder %s66, %s68
    %p72 = scmp.eq.s32.totalorder %s11, 0
    %p73 = por %p71, %p72
    %p74 = scmp.ne.s32.totalorder %s66, %s68
    %p75 = scmp.eq.s32.totalorder %s16, 3
    %p76 = por %p74, %p75
    %p77 = scmp.ne.s32.totalorder %s68, %s69
    %p78 = scmp.eq.s32.totalorder %s16, 0
    %p79 = por %p77, %p78
    %p80 = scmp.ne.s32.totalorder %s68, %s69
    %p81 = scmp.eq.s32.totalorder %s17, 3
    %p82 = por %p80, %p81
    %p84 = scmp.ne.s32.totalorder %s69, %s83
    %p85 = scmp.eq.s32.totalorder %s17, 0
    %p86 = por %p84, %p85
    %s88 = sadd.s32 %s87, 1
    %p91 = scmp.eq.s32.totalorder %s11, 3
    %p92 = scmp.ne.s32.totalorder %s87, %s89
    %p93 = scmp.eq.s32.totalorder %s11, 0
    %p94 = por %p92, %p93
    %p95 = scmp.ne.s32.totalorder %s87, %s89
    %p96 = scmp.eq.s32.totalorder %s16, 3
    %p97 = por %p95, %p96
    %p98 = scmp.ne.s32.totalorder %s89, %s90
    %p99 = scmp.eq.s32.totalorder %s16, 0
    %p100 = por %p98, %p99
    %p101 = scmp.ne.s32.totalorder %s89, %s90
    %p102 = scmp.eq.s32.totalorder %s17, 3
    %p103 = por %p101, %p102
    %p105 = scmp.ne.s32.totalorder %s90, %s104
    %p106 = scmp.eq.s32.totalorder %s17, 0
    %p107 = por %p105, %p106
    %s109 = sadd.s32 %s108, 1
    %p112 = scmp.eq.s32.totalorder %s11, 3
    %p113 = scmp.ne.s32.totalorder %s108, %s110
    %p114 = scmp.eq.s32.totalorder %s11, 0
    %p115 = por %p113, %p114
    %p116 = scmp.ne.s32.totalorder %s108, %s110
    %p117 = scmp.eq.s32.totalorder %s16, 3
    %p118 = por %p116, %p117
    %p119 = scmp.ne.s32.totalorder %s110, %s111
    %p120 = scmp.eq.s32.totalorder %s16, 0
    %p121 = por %p119, %p120
    %p122 = scmp.ne.s32.totalorder %s110, %s111
    %p123 = scmp.eq.s32.totalorder %s17, 3
    %p124 = por %p122, %p123
    %p126 = scmp.ne.s32.totalorder %s111, %s125
    %p127 = scmp.eq.s32.totalorder %s17, 0
    %p128 = por %p126, %p127
    %s129 = ssub.s32 %s11, %s18
    %p130 = scmp.eq.s32.totalorder %s129, 0
    %s132 = sadd.s32 %s131, 1
    %s133 = scalar_select %p130, %s131, %s132
    %p136 = pneg %p130
    %p137 = scmp.eq.s32.totalorder %s11, 3
    %p138 = por %p136, %p137
    %p139 = scmp.ne.s32.totalorder %s131, %s134
    %p140 = scmp.eq.s32.totalorder %s11, 0
    %p141 = por %p139, %p140
    %p142 = scmp.ne.s32.totalorder %s131, %s134
    %p143 = scmp.eq.s32.totalorder %s16, 3
    %p144 = por %p142, %p143
    %p145 = scmp.ne.s32.totalorder %s134, %s135
    %p146 = scmp.eq.s32.totalorder %s16, 0
    %p147 = por %p145, %p146
    %p148 = scmp.ne.s32.totalorder %s134, %s135
    %p149 = scmp.eq.s32.totalorder %s17, 3
    %p150 = por %p148, %p149
    %p152 = scmp.ne.s32.totalorder %s135, %s151
    %p153 = scmp.eq.s32.totalorder %s17, 0
    %p154 = por %p152, %p153
    %p155 = scmp.le.s32.totalorder 1, %s11
    %p156 = scmp.lt.s32.totalorder %s11, 5
    %p157 = pnand %p155, %p156
    %p158 = pneg %p157
    // Predicated region
    $region9: #{with_bias_layernorm.1} parent=5 // pred_check
      _
    $region10: #{with_bias_layernorm.1} parent=5 // pred_check_branch
      %160 = sbr.rel (%p157) target = $region12
    $region11: #{with_bias_layernorm.1} parent=5 // pred_region
      %s161 = ssub.s32 %s11, 1
      // Predicated region
      $region13: #{with_bias_layernorm.1} parent=11 // pred_check
        %p162 = pneg %p58
      $region14: #{with_bias_layernorm.1} parent=11 // pred_check_branch
        %164 = sbr.rel (%p162) target = $region16
      $region15: #{with_bias_layernorm.1} parent=11 // pred_region
        _
      $region16: #{with_bias_layernorm.1} parent=11 // pred_fallthru
        _
      // Predicated region
      $region17: #{with_bias_layernorm.1} parent=11 // pred_check
        %p165 = pneg %p79
      $region18: #{with_bias_layernorm.1} parent=11 // pred_check_branch
        %167 = sbr.rel (%p165) target = $region20
      $region19: #{with_bias_layernorm.1} parent=11 // pred_region
        _
      $region20: #{with_bias_layernorm.1} parent=11 // pred_fallthru
        _
      // Predicated region
      $region21: #{with_bias_layernorm.1} parent=11 // pred_check
        %p168 = pneg %p100
      $region22: #{with_bias_layernorm.1} parent=11 // pred_check_branch
        %170 = sbr.rel (%p168) target = $region24
      $region23: #{with_bias_layernorm.1} parent=11 // pred_region
        _
      $region24: #{with_bias_layernorm.1} parent=11 // pred_fallthru
        _
      // Predicated region
      $region25: #{with_bias_layernorm.1} parent=11 // pred_check
        %p171 = pneg %p121
      $region26: #{with_bias_layernorm.1} parent=11 // pred_check_branch
        %173 = sbr.rel (%p171) target = $region28
      $region27: #{with_bias_layernorm.1} parent=11 // pred_region
        _
      $region28: #{with_bias_layernorm.1} parent=11 // pred_fallthru
        _
    $region12: #{with_bias_layernorm.1} parent=5 // pred_fallthru
      _
    %p174 = scmp.lt.s32.totalorder %s11, 4
    // Predicated region
    $region29: #{with_bias_layernorm.1} parent=5 // pred_check
      %p175 = pneg %p174
    $region30: #{with_bias_layernorm.1} parent=5 // pred_check_branch
      %177 = sbr.rel (%p175) target = $region32
    $region31: #{with_bias_layernorm.1} parent=5 // pred_region
      // Predicated region
      $region33: #{with_bias_layernorm.1} parent=31 // pred_check
        %p178 = pneg %p31
      $region34: #{with_bias_layernorm.1} parent=31 // pred_check_branch
        %180 = sbr.rel (%p178) target = $region36
      $region35: #{with_bias_layernorm.1} parent=31 // pred_region
        %p181 = scmp.lt.s32.totalorder %s11, 3
        %s182 = scalar_select %p181, %s11, 3
        %s183 = smul.addr %s182, 8
        %s184 = scalar_lea.vmem %s0, %s183
      $region36: #{with_bias_layernorm.1} parent=31 // pred_fallthru
        _
    $region32: #{with_bias_layernorm.1} parent=5 // pred_fallthru
      _
    %p185 = scmp.le.s32.totalorder 1, %s11
    %p186 = scmp.lt.s32.totalorder %s11, 5
    %p187 = pnand %p185, %p186
    %p188 = pneg %p187
    // Predicated region
    $region37: #{with_bias_layernorm.1} parent=5 // pred_check
      _
    $region38: #{with_bias_layernorm.1} parent=5 // pred_check_branch
      %190 = sbr.rel (%p187) target = $region40
    $region39: #{with_bias_layernorm.1} parent=5 // pred_region
      %s191 = ssub.s32 %s11, 1
      %p192 = scmp.lt.s32.totalorder %s16, 3
      %s193 = scalar_select %p192, %s16, 3
      %s194 = smul.addr %s193, 8
      %s195 = scalar_lea.vmem %s0, %s194
      %p196 = pneg %p37
      %p197 = pneg %p34
      %p198 = pneg %p58
      %p199 = pneg %p55
      %p200 = pneg %p79
      %p201 = pneg %p76
      %p202 = pneg %p100
      %p203 = pneg %p97
      %p204 = pneg %p121
      %p205 = pneg %p118
      %p206 = pneg %p147
      %p207 = pneg %p144
      %p208 = scmp.lt.s32.totalorder %s16, 3
      %s209 = scalar_select %p208, %s16, 3
      %s210 = smul.addr %s209, 8
      %s211 = scalar_lea.vmem %s5, %s210
      %p212 = scmp.lt.s32.totalorder %s16, 3
      %s213 = scalar_select %p212, %s16, 3
      %s214 = smul.addr %s213, 8
      %s215 = scalar_lea.vmem %s0, %s214
      %p216 = scmp.lt.s32.totalorder %s16, 3
      %s217 = scalar_select %p216, %s16, 3
      %s218 = smul.addr %s217, 8
      %s219 = scalar_lea.vmem %s5, %s218
      %v220 = vld [vmem:[%s215] sm:$0xff]
      %v221 = vld [vmem:[%s1] sm:$0xff]
      %v222 = vld [vmem:[%s1 + $0x8] sm:$0xff]
      %v223 = vld [vmem:[%s1 + $0x10] sm:$0xff]
      %v224 = vld [vmem:[%s1 + $0x18] sm:$0xff]
      %v225 = vld [vmem:[%s1 + $0x20] sm:$0xff]
      %v226 = vld [vmem:[%s1 + $0x28] sm:$0xff]
      %v227 = vld [vmem:[%s1 + $0x30] sm:$0xff]
      %v228 = vld [vmem:[%s1 + $0x38] sm:$0xff]
      %v229 = vld [vmem:[%s1 + $0x40] sm:$0xff]
      %v230 = vld [vmem:[%s1 + $0x48] sm:$0xff]
      %v231 = vld [vmem:[%s1 + $0x50] sm:$0xff]
      %v232 = vld [vmem:[%s1 + $0x58] sm:$0xff]
      %v233 = vld [vmem:[%s1 + $0x60] sm:$0xff]
      %v234 = vld [vmem:[%s1 + $0x68] sm:$0xff]
      %v235 = vld [vmem:[%s1 + $0x70] sm:$0xff]
      %v236 = vld [vmem:[%s1 + $0x78] sm:$0xff]
      %v237 = vld [vmem:[%s2] sm:$0xff]
      %v238 = vld [vmem:[%s2 + $0x8] sm:$0xff]
      %239 = vmatpush.msra.mxu0 %v236
      %240 = vmatpush.msra.mxu0 %v235
      %241 = vmatpush.msra.mxu0 %v234
      %242 = vmatpush.msra.mxu0 %v233
      %243 = vmatpush.msra.mxu0 %v232
      %244 = vmatpush.msra.mxu0 %v231
      %245 = vmatpush.msra.mxu0 %v230
      %246 = vmatpush.msra.mxu0 %v229
      %247 = vmatpush.msra.mxu0 %v228
      %248 = vmatpush.msra.mxu0 %v227
      %249 = vmatpush.msra.mxu0 %v226
      %250 = vmatpush.msra.mxu0 %v225
      %251 = vmatpush.msra.mxu0 %v224
      %252 = vmatpush.msra.mxu0 %v223
      %253 = vmatpush.msra.mxu0 %v222
      %254 = vmatpush.msra.mxu0 %v221
      %255 = vmatmul.f32.gmra.mxu0 %v220
      %v256 = vpop.f32.mrf.mxu0
      %v257 = vadd.f32 0.0, %v256
      %258 = vdwg.mxu0
      %vm259 = vcmask 130048
      %v261 = vsel %vm259, %v257, 0
      %263 = vmatpush.msra.mxu0 0.0
      %264 = vmatpush.msra.mxu0 0.0
      %265 = vmatpush.msra.mxu0 0.0
      %266 = vmatpush.msra.mxu0 0.0
      %267 = vmatpush.msra.mxu0 0.0
      %268 = vmatpush.msra.mxu0 0.0
      %269 = vmatpush.msra.mxu0 0.0
      %270 = vmatpush.msra.mxu0 0.0
      %271 = vmatpush.msra.mxu0 0.0
      %272 = vmatpush.msra.mxu0 0.0
      %273 = vmatpush.msra.mxu0 0.0
      %274 = vmatpush.msra.mxu0 0.0
      %275 = vmatpush.msra.mxu0 0.0
      %276 = vmatpush.msra.mxu0 0.0
      %277 = vmatpush.msra.mxu0 %v238
      %278 = vmatpush.msra.mxu0 %v237
      %279 = vmatmul.f32.gmra.mxu0 %v261
      %v280 = vpop.f32.mrf.mxu0
      %v281 = vadd.f32 0.0, %v280
      %282 = vdwg.mxu0
      %v283 = vsub.f32 %v220, %v281
      %v284 = vmul.f32 %v283, %v283
      %285 = vmatpush.msra.mxu0 %v236
      %286 = vmatpush.msra.mxu0 %v235
      %287 = vmatpush.msra.mxu0 %v234
      %288 = vmatpush.msra.mxu0 %v233
      %289 = vmatpush.msra.mxu0 %v232
      %290 = vmatpush.msra.mxu0 %v231
      %291 = vmatpush.msra.mxu0 %v230
      %292 = vmatpush.msra.mxu0 %v229
      %293 = vmatpush.msra.mxu0 %v228
      %294 = vmatpush.msra.mxu0 %v227
      %295 = vmatpush.msra.mxu0 %v226
      %296 = vmatpush.msra.mxu0 %v225
      %297 = vmatpush.msra.mxu0 %v224
      %298 = vmatpush.msra.mxu0 %v223
      %299 = vmatpush.msra.mxu0 %v222
      %300 = vmatpush.msra.mxu0 %v221
      %301 = vmatmul.f32.gmra.mxu0 %v284
      %v302 = vpop.f32.mrf.mxu0
      %v303 = vadd.f32 0.0, %v302
      %304 = vdwg.mxu0
      %v306 = vsel %vm259, %v303, 0
      %308 = vmatpush.msra.mxu0 0.0
      %309 = vmatpush.msra.mxu0 0.0
      %310 = vmatpush.msra.mxu0 0.0
      %311 = vmatpush.msra.mxu0 0.0
      %312 = vmatpush.msra.mxu0 0.0
      %313 = vmatpush.msra.mxu0 0.0
      %314 = vmatpush.msra.mxu0 0.0
      %315 = vmatpush.msra.mxu0 0.0
      %316 = vmatpush.msra.mxu0 0.0
      %317 = vmatpush.msra.mxu0 0.0
      %318 = vmatpush.msra.mxu0 0.0
      %319 = vmatpush.msra.mxu0 0.0
      %320 = vmatpush.msra.mxu0 0.0
      %321 = vmatpush.msra.mxu0 0.0
      %322 = vmatpush.msra.mxu0 %v238
      %323 = vmatpush.msra.mxu0 %v237
      %324 = vmatmul.f32.gmra.mxu0 %v306
      %v325 = vpop.f32.mrf.mxu0
      %v326 = vadd.f32 1e-05, %v325
      %327 = vdwg.mxu0
      %v328 = vrsqrt.pop %v326
      %v329 = vmul.f32 %v328, %v326
      %v330 = vmul.f32 %v329, %v328
      %v331 = vmul.f32 0.5, %v330
      %v332 = vsub.f32 1.5, %v331
      %v333 = vmul.f32 %v328, %v332
      %vm334 = vweird.f32 %v326
      %vm335 = vweird.f32 %v328
      %vm336 = vmor %vm334, %vm335
      %v337 = vsel %vm336, %v328, %v333
      %v338 = vmul.f32 %v283, %v337
      %v339 = vld [vmem:[%s3] sm:$0x1]
      %v341 = vperm.slane %v339, 0
      %v343 = vmul.f32 %v338, %v341
      %v344 = vld [vmem:[%s4] sm:$0x1]
      %v346 = vperm.slane %v344, 0
      %v348 = vadd.f32 %v343, %v346
      %349 = vst [vmem:[%s219] sm:$0xff] %v348
      %p350 = scmp.lt.s32.totalorder %s16, 3
      %s351 = scalar_select %p350, %s16, 3
      %s352 = smul.addr %s351, 8
      %s353 = scalar_lea.vmem %s5, %s352
      // Predicated region
      $region41: #{with_bias_layernorm.1} parent=39 // pred_check
        %p354 = pneg %p144
      $region42: #{with_bias_layernorm.1} parent=39 // pred_check_branch
        %356 = sbr.rel (%p354) target = $region44
      $region43: #{with_bias_layernorm.1} parent=39 // pred_region
        _
      $region44: #{with_bias_layernorm.1} parent=39 // pred_fallthru
        _
    $region40: #{with_bias_layernorm.1} parent=5 // pred_fallthru
      _
    %p357 = scmp.le.s32.totalorder 2, %s11
    // Predicated region
    $region45: #{with_bias_layernorm.1} parent=5 // pred_check
      %p358 = pneg %p357
    $region46: #{with_bias_layernorm.1} parent=5 // pred_check_branch
      %360 = sbr.rel (%p358) target = $region48
    $region47: #{with_bias_layernorm.1} parent=5 // pred_region
      %s361 = ssub.s32 %s11, 2
      // Predicated region
      $region49: #{with_bias_layernorm.1} parent=47 // pred_check
        %p362 = pneg %p150
      $region50: #{with_bias_layernorm.1} parent=47 // pred_check_branch
        %364 = sbr.rel (%p362) target = $region52
      $region51: #{with_bias_layernorm.1} parent=47 // pred_region
        %p365 = scmp.lt.s32.totalorder %s17, 3
        %s366 = scalar_select %p365, %s17, 3
        %s367 = smul.addr %s366, 8
        %s368 = scalar_lea.vmem %s5, %s367
      $region52: #{with_bias_layernorm.1} parent=47 // pred_fallthru
        _
    $region48: #{with_bias_layernorm.1} parent=5 // pred_fallthru
      _
  $region6: #{with_bias_layernorm.1} parent=0 // loop_footer
    %s15 = sadd.s32 1, %s11
  $region7: #{with_bias_layernorm.1} parent=0 // loop_footer_branch
    %10 = sbr.rel target = $region3
  $region8: #{with_bias_layernorm.1} parent=0 // loop_exit
    _

</llo_original>
